<compile_context>
chip_gen: v6e
topology: v6e:2x2x1
jax: 0.10.0
libtpu: 0.0.40
codegen_flags: <defaults>
</compile_context>

<pallas_src>
import jax
import jax.numpy as jnp
from jax import lax
from jax.experimental import pallas as pl
from jax.experimental.pallas import tpu as pltpu


def _round_up(x, m):
    return -(-x // m) * m


def _biological_neuron_kernel(xt_ref, xb_ref, wt_ref, wb_ref, scal_ref, out_ref):
    """One batch tile.

    xt_ref  : [TB, Dt] VMEM   x_top tile
    xb_ref  : [TB, Db] VMEM   x_base tile
    wt_ref  : [2,  Dt] VMEM   rows = [top_weights, gating_weights]
    wb_ref  : [1,  Db] VMEM   base_weights (output_required term pre-folded)
    scal_ref: [5]      SMEM   [top_bias, base_bias, out_w0, out_w1, out_bias]
    out_ref : [1,  TB] VMEM   sigmoid output, batch on the lane axis
    """
    xt = xt_ref[...]          # [TB, Dt]
    xb = xb_ref[...]          # [TB, Db]
    wt = wt_ref[...]          # [2,  Dt]
    wb = wb_ref[...]          # [1,  Db]

    # MXU contractions with batch on lanes: [k, D] x [TB, D]^T -> [k, TB].
    # Contracting the last dim of both operands is the standard q.k^T pattern.
    dn = (((1,), (1,)), ((), ()))
    s_top = lax.dot_general(wt, xt, dimension_numbers=dn,
                            preferred_element_type=jnp.float32,
                            precision=lax.Precision.HIGHEST)       # [2, TB]
    s_base = lax.dot_general(wb, xb, dimension_numbers=dn,
                             preferred_element_type=jnp.float32,
                             precision=lax.Precision.HIGHEST)      # [1, TB]

    top_bias = scal_ref[0]
    base_bias = scal_ref[1]
    out_w0 = scal_ref[2]
    out_w1 = scal_ref[3]
    out_bias = scal_ref[4]

    # Lane-dense epilogue on [1, TB] rows.
    local_activity = s_top[0:1, :] + top_bias
    gate_open = jax.nn.sigmoid(s_top[1:2, :])
    top_contribution = local_activity * gate_open
    base_contribution = s_base + base_bias          # 0.1*mean folded into wb

    pre = top_contribution * out_w0 + base_contribution * out_w1 + out_bias
    out_ref[...] = jax.nn.sigmoid(pre).astype(out_ref.dtype)


def _vmem_capacity_bytes():
    """Per-core VMEM capacity; conservative 64 MiB (v7x per-TC) fallback."""
    try:
        info = pltpu.get_tpu_info()
        for name in ("vmem_capacity_bytes", "vmem_size_bytes", "vmem_bytes"):
            cap = getattr(info, name, None)
            if cap:
                return int(cap)
    except Exception:
        pass
    return 64 * 1024 * 1024


def _pick_batch_tile(batch, d_top, d_base, itemsize, vmem_cap):
    """Pick the batch tile size tb.

    VMEM accounting uses the *lane-padded* feature widths (round_up(D, 128)),
    since that is what the (tb, D) blocks actually occupy in VMEM, and assumes
    BlockSpec double-buffers both inputs.  For B > 1024 at least two grid
    steps are produced so a megacore/2-TC chip gets work on both cores.
    """
    padded_row = (_round_up(d_top, 128) + _round_up(d_base, 128)) * itemsize
    # Total budget for the double-buffered input tiles (both inputs, x2 bufs).
    budget_inputs = max(8 << 20, min(vmem_cap // 3, 40 << 20))
    cap = budget_inputs // (2 * padded_row)
    cap = max(256, min(int(cap), 16384))
    cap = (cap // 128) * 128
    if batch <= 1024 and batch <= cap:
        return batch                       # single tile, full-dim blocks
    num_tiles = max(2, -(-batch // cap))   # >= 2 tiles: feed both v7x TCs
    tb = min(cap, _round_up(-(-batch // num_tiles), 128))
    return tb


def biological_neuron(x_top, x_base, params, output_required=False):
    """JAX wrapper mirroring BiologicalNeuron.forward. Returns shape [B], f32."""
    B, d_top = x_top.shape
    Bb, d_base = x_base.shape
    assert B == Bb, (B, Bb)
    xdtype = x_top.dtype
    itemsize = jnp.dtype(xdtype).itemsize

    top_w = params["top_weights"].astype(jnp.float32)
    gate_w = params["gating_weights"].astype(jnp.float32)
    base_w = params["base_weights"].astype(jnp.float32)
    if output_required:
        # sum(x * (w + 0.1/Db)) == sum(x * w) + 0.1 * mean(x)
        base_w = base_w + jnp.float32(0.1) / jnp.float32(d_base)

    wt = jnp.stack([top_w, gate_w], axis=0).astype(xdtype)    # [2, Dt]
    wb = base_w.reshape(1, d_base).astype(xdtype)             # [1, Db]

    scalars = jnp.concatenate([
        params["top_bias"].reshape(1),
        params["base_bias"].reshape(1),
        params["output_weight"].reshape(2),
        params["output_bias"].reshape(1),
    ]).astype(jnp.float32)                                    # (5,)

    vmem_cap = _vmem_capacity_bytes()
    tb = _pick_batch_tile(B, d_top, d_base, itemsize, vmem_cap)
    n_tiles = -(-B // tb)
    # Only the tiny f32 output is logically padded (no jnp.pad of the inputs).
    b_out = B if n_tiles == 1 else _round_up(B, 128)

    cost = pl.CostEstimate(
        flops=int(2 * B * (2 * d_top + d_base) + 10 * B),
        transcendentals=int(2 * B),
        bytes_accessed=int(B * (d_top + d_base) * itemsize + 4 * b_out
                           + (2 * d_top + d_base) * itemsize + 5 * 4),
    )
    vmem_limit = int(max(32 << 20, min(vmem_cap - (16 << 20), 64 << 20)))

    out = pl.pallas_call(
        _biological_neuron_kernel,
        out_shape=jax.ShapeDtypeStruct((1, b_out), jnp.float32),
        grid=(n_tiles,),
        in_specs=[
            pl.BlockSpec((tb, d_top), lambda i: (i, 0)),        # x_top tile
            pl.BlockSpec((tb, d_base), lambda i: (i, 0)),       # x_base tile
            pl.BlockSpec((2, d_top), lambda i: (0, 0)),         # [top; gating] w
            pl.BlockSpec((1, d_base), lambda i: (0, 0)),        # base weights
            pl.BlockSpec(memory_space=pltpu.MemorySpace.SMEM),  # scalar params
        ],
        out_specs=pl.BlockSpec((1, tb), lambda i: (0, i)),
        compiler_params=pltpu.CompilerParams(
            dimension_semantics=("parallel",),
            vmem_limit_bytes=vmem_limit),
        cost_estimate=cost,
    )(x_top, x_base, wt, wb, scalars)

    return out[0, :B]


def _reference(x_top, x_base, params, output_required=False):
    """Pure-JAX reference replicating the PyTorch forward exactly."""
    top_input = x_top * params["top_weights"][None, :]
    local_activity = top_input.sum(axis=1) + params["top_bias"]
    gate_signal = (x_top * params["gating_weights"][None, :]).sum(axis=1)
    gate_open = jax.nn.sigmoid(gate_signal)
    top_contribution = local_activity * gate_open
    base_contribution = (x_base * params["base_weights"][None, :]).sum(axis=1) \
        + params["base_bias"]
    if output_required:
        base_contribution = base_contribution + 0.1 * x_base.mean(axis=1)
    combined = jnp.stack([top_contribution, base_contribution], axis=1)
    return jax.nn.sigmoid(combined @ params["output_weight"]
                          + params["output_bias"])


if __name__ == "__main__":
    key = jax.random.PRNGKey(0)
    k_xt, k_xb, k_tw, k_bw, k_gw, k_ow, k_big = jax.random.split(key, 7)

    D_TOP, D_BASE = 16, 32

    # randn weights, zero biases — matches the PyTorch __init__.
    params = {
        "top_weights": jax.random.normal(k_tw, (D_TOP,), jnp.float32),
        "top_bias": jnp.zeros((1,), jnp.float32),
        "base_weights": jax.random.normal(k_bw, (D_BASE,), jnp.float32),
        "base_bias": jnp.zeros((1,), jnp.float32),
        "gating_weights": jax.random.normal(k_gw, (D_TOP,), jnp.float32),
        "output_weight": jax.random.normal(k_ow, (2,), jnp.float32),
        "output_bias": jnp.zeros((1,), jnp.float32),
    }

    # Small case (single tile, grid=(1,), full-dim blocks).
    B = 2
    x_top = jax.random.normal(k_xt, (B, D_TOP), jnp.float32)
    x_base = jax.random.normal(k_xb, (B, D_BASE), jnp.float32)
    for required in (False, True):
        out = jax.block_until_ready(
            biological_neuron(x_top, x_base, params, output_required=required))
        ref = _reference(x_top, x_base, params, output_required=required)
        assert out.shape == (B,), out.shape
        assert jnp.allclose(out, ref, atol=1e-4, rtol=1e-4), (out, ref)

    # Larger, non-multiple batch: exercises the multi-step grid, lane-dense
    # output blocks, and the un-padded ragged last block.
    B2 = 4100
    kx1, kx2 = jax.random.split(k_big)
    x_top2 = jax.random.normal(kx1, (B2, D_TOP), jnp.float32)
    x_base2 = jax.random.normal(kx2, (B2, D_BASE), jnp.float32)
    out2 = jax.block_until_ready(
        biological_neuron(x_top2, x_base2, params, output_required=True))
    ref2 = _reference(x_top2, x_base2, params, output_required=True)
    assert out2.shape == (B2,), out2.shape
    assert jnp.allclose(out2, ref2, atol=1e-4, rtol=1e-4)

    print("KERNEL_OK")
</pallas_src>

<mosaic_0001>
module attributes {stable_mosaic.version = 11 : i64} {
  func.func @_biological_neuron_kernel(%arg0: i32, %arg1: memref<2x16xf32, #tpu.memory_space<vmem>>, %arg2: memref<2x32xf32, #tpu.memory_space<vmem>>, %arg3: memref<2x16xf32, #tpu.memory_space<vmem>>, %arg4: memref<1x32xf32, #tpu.memory_space<vmem>>, %arg5: memref<5xf32, #tpu.memory_space<smem>>, %arg6: memref<1x2xf32, #tpu.memory_space<vmem>>) attributes {dimension_semantics = [#tpu.dimension_semantics<parallel>], iteration_bounds = array<i64: 1>, scalar_prefetch = 0 : i64, scratch_operands = 0 : i64, tpu.core_type = #tpu.core_type<tc>, window_params = [{transform_indices = @transform_0, window_bounds = array<i64: 2, 16>}, {transform_indices = @transform_1, window_bounds = array<i64: 2, 32>}, {pipeline_mode = #tpu.pipeline_mode<synchronous>, transform_indices = @transform_2, window_bounds = array<i64: 2, 16>}, {pipeline_mode = #tpu.pipeline_mode<synchronous>, transform_indices = @transform_3, window_bounds = array<i64: 1, 32>}, {transform_indices = @transform_4, window_bounds = array<i64: 5>}, {transform_indices = @transform_5, window_bounds = array<i64: 1, 2>}]} {
    %c0 = arith.constant 0 : index
    %c0_0 = arith.constant 0 : index
    %0 = vector.load %arg1[%c0, %c0_0] : memref<2x16xf32, #tpu.memory_space<vmem>>, vector<2x16xf32>
    %c0_1 = arith.constant 0 : index
    %c0_2 = arith.constant 0 : index
    %1 = vector.load %arg2[%c0_1, %c0_2] : memref<2x32xf32, #tpu.memory_space<vmem>>, vector<2x32xf32>
    %c0_3 = arith.constant 0 : index
    %c0_4 = arith.constant 0 : index
    %2 = vector.load %arg3[%c0_3, %c0_4] : memref<2x16xf32, #tpu.memory_space<vmem>>, vector<2x16xf32>
    %c0_5 = arith.constant 0 : index
    %c0_6 = arith.constant 0 : index
    %3 = vector.load %arg4[%c0_5, %c0_6] : memref<1x32xf32, #tpu.memory_space<vmem>>, vector<1x32xf32>
    %cst = arith.constant dense<0.000000e+00> : vector<2x2xf32>
    %4 = tpu.matmul %2, %0, %cst {dimension_numbers = #tpu.dot_dimension_numbers<[1], [1], [0], [0], [0, 0, 1, 0], [], []>, precision = #tpu.contract_precision<fp32>} : vector<2x16xf32>, vector<2x16xf32>, vector<2x2xf32> -> vector<2x2xf32>
    %cst_7 = arith.constant dense<0.000000e+00> : vector<1x2xf32>
    %5 = tpu.matmul %3, %1, %cst_7 {dimension_numbers = #tpu.dot_dimension_numbers<[1], [1], [0], [0], [0, 0, 1, 0], [], []>, precision = #tpu.contract_precision<fp32>} : vector<1x32xf32>, vector<2x32xf32>, vector<1x2xf32> -> vector<1x2xf32>
    %c0_8 = arith.constant 0 : index
    %6 = memref.load %arg5[%c0_8] : memref<5xf32, #tpu.memory_space<smem>>
    %c1 = arith.constant 1 : index
    %7 = memref.load %arg5[%c1] : memref<5xf32, #tpu.memory_space<smem>>
    %c2 = arith.constant 2 : index
    %8 = memref.load %arg5[%c2] : memref<5xf32, #tpu.memory_space<smem>>
    %c3 = arith.constant 3 : index
    %9 = memref.load %arg5[%c3] : memref<5xf32, #tpu.memory_space<smem>>
    %c4 = arith.constant 4 : index
    %10 = memref.load %arg5[%c4] : memref<5xf32, #tpu.memory_space<smem>>
    %11 = vector.extract_strided_slice %4 {offsets = [0, 0], sizes = [1, 2], strides = [1, 1]} : vector<2x2xf32> to vector<1x2xf32>
    %12 = vector.broadcast %6 : f32 to vector<1x2xf32>
    %13 = arith.addf %11, %12 : vector<1x2xf32>
    %14 = vector.extract_strided_slice %4 {offsets = [1, 0], sizes = [1, 2], strides = [1, 1]} : vector<2x2xf32> to vector<1x2xf32>
    %15 = arith.negf %14 : vector<1x2xf32>
    %16 = math.exp %15 : vector<1x2xf32>
    %cst_9 = arith.constant 1.000000e+00 : f32
    %17 = vector.broadcast %cst_9 : f32 to vector<1x2xf32>
    %18 = arith.addf %17, %16 : vector<1x2xf32>
    %19 = arith.divf %17, %18 : vector<1x2xf32>
    %20 = arith.mulf %13, %19 : vector<1x2xf32>
    %21 = vector.broadcast %7 : f32 to vector<1x2xf32>
    %22 = arith.addf %5, %21 : vector<1x2xf32>
    %23 = vector.broadcast %8 : f32 to vector<1x2xf32>
    %24 = arith.mulf %20, %23 : vector<1x2xf32>
    %25 = vector.broadcast %9 : f32 to vector<1x2xf32>
    %26 = arith.mulf %22, %25 : vector<1x2xf32>
    %27 = arith.addf %24, %26 : vector<1x2xf32>
    %28 = vector.broadcast %10 : f32 to vector<1x2xf32>
    %29 = arith.addf %27, %28 : vector<1x2xf32>
    %30 = arith.negf %29 : vector<1x2xf32>
    %31 = math.exp %30 : vector<1x2xf32>
    %cst_10 = arith.constant 1.000000e+00 : f32
    %32 = vector.broadcast %cst_10 : f32 to vector<1x2xf32>
    %33 = arith.addf %32, %31 : vector<1x2xf32>
    %34 = arith.divf %32, %33 : vector<1x2xf32>
    %c0_11 = arith.constant 0 : index
    %c0_12 = arith.constant 0 : index
    %35 = vector.load %arg6[%c0_11, %c0_12] : memref<1x2xf32, #tpu.memory_space<vmem>>, vector<1x2xf32>
    tpu.vector_store %arg6[%c0_11, %c0_12], %34 {strides = array<i32>} : memref<1x2xf32, #tpu.memory_space<vmem>>, vector<1x2xf32>,
    return
  }
  func.func @transform_0(%arg0: i32) -> (i32, i32) {
    %c0_i32 = arith.constant 0 : i32
    %c0_i32_0 = arith.constant 0 : i32
    return %arg0, %c0_i32 : i32, i32
  }
  func.func @transform_1(%arg0: i32) -> (i32, i32) {
    %c0_i32 = arith.constant 0 : i32
    %c0_i32_0 = arith.constant 0 : i32
    return %arg0, %c0_i32 : i32, i32
  }
  func.func @transform_2(%arg0: i32) -> (i32, i32) {
    %c0_i32 = arith.constant 0 : i32
    %c0_i32_0 = arith.constant 0 : i32
    %c0_i32_1 = arith.constant 0 : i32
    return %c0_i32, %c0_i32_0 : i32, i32
  }
  func.func @transform_3(%arg0: i32) -> (i32, i32) {
    %c0_i32 = arith.constant 0 : i32
    %c0_i32_0 = arith.constant 0 : i32
    %c0_i32_1 = arith.constant 0 : i32
    return %c0_i32, %c0_i32_0 : i32, i32
  }
  func.func @transform_4(%arg0: i32) -> i32 {
    %c0_i32 = arith.constant 0 : i32
    %c0_i32_0 = arith.constant 0 : i32
    return %c0_i32 : i32
  }
  func.func @transform_5(%arg0: i32) -> (i32, i32) {
    %c0_i32 = arith.constant 0 : i32
    %c0_i32_0 = arith.constant 0 : i32
    return %c0_i32, %arg0 : i32, i32
  }
}

</mosaic_0001>

<llo_original>
// kernel: tpu_custom_call.1
$region0: #{tpu_custom_call.1}
  #allocation0 [shape = 'u32[]', space=smem, size = 0x4, offset = 0x4, fixed_abs, tag = 'smem constant byte address 0x4 - core index']
  #allocation1 [shape = 'u32[144,128]{1,0:T(1,128)}', space=vmem, size = 0x12000, scoped, tag = 'internal scratch']
  %s0 = inlined_call_operand.hbm [shape: f32[2,16], index: 0, kind: input, shape index: {}]
  %s1 = inlined_call_operand.hbm [shape: f32[2,32], index: 1, kind: input, shape index: {}]
  %s2 = inlined_call_operand.vmem [shape: f32[2,16], index: 2, kind: input, shape index: {}]
  %s3 = inlined_call_operand.vmem [shape: f32[1,32], index: 3, kind: input, shape index: {}]
  %s4 = inlined_call_operand.vmem [shape: f32[5], index: 4, kind: input, shape index: {}]
  %s5 = inlined_call_operand.hbm [shape: f32[1,2], index: 5, kind: output, shape index: {}]
  %s6 = sld [smem:[#allocation0]]
  $region42: #{tpu_custom_call.1} parent=0
    _
  %s8 = ssub.s32 1, %s6
  %s9 = scalar_select 0, %s8, %s6
  $region1: #{tpu_custom_call.1} parent=0
    #allocation2 [shape = 'u8[1024]{0}', space=vmem, size = 0x400, scoped, tag = 'input window, operand 0, single buffered']
    #allocation3 [shape = 's32[1]{0}', space=sflag, size = 0x4, scoped, tag = 'scoped memory for tpu_custom_call.1']
    #allocation4 [shape = 's32[1]{0}', space=sflag, size = 0x4, scoped, tag = 'scoped memory for tpu_custom_call.1']
    #allocation5 [shape = 's32[1]{0}', space=sflag, size = 0x4, scoped, tag = 'scoped memory for tpu_custom_call.1']
    #allocation6 [shape = 'u8[1024]{0}', space=vmem, size = 0x400, scoped, tag = 'input window, operand 1, single buffered']
    #allocation7 [shape = 's32[1]{0}', space=sflag, size = 0x4, scoped, tag = 'scoped memory for tpu_custom_call.1']
    #allocation8 [shape = 'u8[512]{0}', space=smem, size = 0x200, scoped, tag = 'input window, operand 4, single buffered']
    #allocation9 [shape = 'u8[512]{0}', space=vmem, size = 0x400, scoped, tag = 'output window, operand 0, single buffered']
    %10 = vsyncpa [#allocation3], 0
    %11 = vsyncpa [#allocation7], 0
    %12 = vsyncpa [#allocation5], 0
    %13 = vsyncpa [#allocation4], 0
    // Predicated region
    $region2: #{tpu_custom_call.1} parent=1 // pred_check
      _
    $region3: #{tpu_custom_call.1} parent=1 // pred_check_branch
      %15 = sbr.rel (0) target = $region5
    $region4: #{tpu_custom_call.1} parent=1 // pred_region
      %s17 = ssub.s32 32, 32
      %18 = vsyncadd [#allocation3], %s17
      %s20 = sshll.u32 [#allocation2], 4
      %s21 = int_to_ptr.vmem [resolvable:$true] %s20
      %23 = dma.hbm_to_vmem [thread:$0]  %s0, 32, %s21, [#allocation3]
    $region5: #{tpu_custom_call.1} parent=1 // pred_fallthru
      _
    // Predicated region
    $region6: #{tpu_custom_call.1} parent=1 // pred_check
      _
    $region7: #{tpu_custom_call.1} parent=1 // pred_check_branch
      %25 = sbr.rel (0) target = $region9
    $region8: #{tpu_custom_call.1} parent=1 // pred_region
      %s27 = ssub.s32 32, 32
      %28 = vsyncadd [#allocation7], %s27
      %s30 = sshll.u32 [#allocation6], 4
      %s31 = int_to_ptr.vmem [resolvable:$true] %s30
      %33 = dma.hbm_to_vmem [thread:$0]  %s1, 32, %s31, [#allocation7]
    $region9: #{tpu_custom_call.1} parent=1 // pred_fallthru
      _
    // Predicated region
    $region10: #{tpu_custom_call.1} parent=1 // pred_check
      _
    $region11: #{tpu_custom_call.1} parent=1 // pred_check_branch
      %35 = sbr.rel (0) target = $region13
    $region12: #{tpu_custom_call.1} parent=1 // pred_region
      _
    $region13: #{tpu_custom_call.1} parent=1 // pred_fallthru
      _
    // Predicated region
    $region14: #{tpu_custom_call.1} parent=1 // pred_check
      _
    $region15: #{tpu_custom_call.1} parent=1 // pred_check_branch
      %37 = sbr.rel (0) target = $region17
    $region16: #{tpu_custom_call.1} parent=1 // pred_region
      _
    $region17: #{tpu_custom_call.1} parent=1 // pred_fallthru
      _
    // Predicated region
    $region18: #{tpu_custom_call.1} parent=1 // pred_check
      _
    $region19: #{tpu_custom_call.1} parent=1 // pred_check_branch
      %39 = sbr.rel (0) target = $region21
    $region20: #{tpu_custom_call.1} parent=1 // pred_region
      %s41 = ssub.s32 16, 16
      %42 = vsyncadd [#allocation5], %s41
      %s44 = sshll.u32 %s4, 4
      %s45 = int_to_ptr.vmem [resolvable:$true] %s44
      %47 = dma.vmem_to_smem %s45, 16, [#allocation8], [#allocation5]
    $region21: #{tpu_custom_call.1} parent=1 // pred_fallthru
      _
    // Predicated region
    $region22: #{tpu_custom_call.1} parent=1 // pred_check
      _
    $region23: #{tpu_custom_call.1} parent=1 // pred_check_branch
      %49 = sbr.rel (0) target = $region25
    $region24: #{tpu_custom_call.1} parent=1 // pred_region
      %50 = dma.done [#allocation3], 32
    $region25: #{tpu_custom_call.1} parent=1 // pred_fallthru
      _
    // Predicated region
    $region26: #{tpu_custom_call.1} parent=1 // pred_check
      _
    $region27: #{tpu_custom_call.1} parent=1 // pred_check_branch
      %52 = sbr.rel (0) target = $region29
    $region28: #{tpu_custom_call.1} parent=1 // pred_region
      %53 = dma.done [#allocation7], 32
    $region29: #{tpu_custom_call.1} parent=1 // pred_fallthru
      _
    // Predicated region
    $region30: #{tpu_custom_call.1} parent=1 // pred_check
      _
    $region31: #{tpu_custom_call.1} parent=1 // pred_check_branch
      %55 = sbr.rel (0) target = $region33
    $region32: #{tpu_custom_call.1} parent=1 // pred_region
      %56 = dma.done [#allocation5], 16
    $region33: #{tpu_custom_call.1} parent=1 // pred_fallthru
      _
    %57 = sfence
    %v58 = vld [vmem:[#allocation2] sm:$0x3]
    %v59 = vld [vmem:[#allocation6] sm:$0x3]
    %v60 = vld [vmem:[%s2] sm:$0x3]
    %v61 = vld [vmem:[%s3] sm:$0x1]
    %vm62 = vcmask 130048
    %v64 = vsel %vm62, %v60, 0
    %v67 = vsel %vm62, %v58, 0
    %69 = vmatprep.subr.mxu0 0.0
    %70 = vmatpush1.xpose.msra.mxu0 0.0
    %71 = vmatprep.subr.mxu0 0.0
    %72 = vmatpush1.xpose.msra.mxu0 0.0
    %73 = vmatprep.subr.mxu0 0.0
    %74 = vmatpush1.xpose.msra.mxu0 0.0
    %75 = vmatprep.subr.mxu0 0.0
    %76 = vmatpush1.xpose.msra.mxu0 0.0
    %77 = vmatprep.subr.mxu0 0.0
    %78 = vmatpush1.xpose.msra.mxu0 0.0
    %79 = vmatprep.subr.mxu0 0.0
    %80 = vmatpush1.xpose.msra.mxu0 0.0
    %81 = vmatprep.subr.mxu0 0.0
    %82 = vmatpush1.xpose.msra.mxu0 0.0
    %83 = vmatprep.subr.mxu0 0.0
    %84 = vmatpush1.xpose.msra.mxu0 0.0
    %85 = vmatprep.subr.mxu0 0.0
    %86 = vmatpush1.xpose.msra.mxu0 0.0
    %87 = vmatprep.subr.mxu0 0.0
    %88 = vmatpush1.xpose.msra.mxu0 0.0
    %89 = vmatprep.subr.mxu0 0.0
    %90 = vmatpush1.xpose.msra.mxu0 0.0
    %91 = vmatprep.subr.mxu0 0.0
    %92 = vmatpush1.xpose.msra.mxu0 0.0
    %93 = vmatprep.subr.mxu0 0.0
    %94 = vmatpush1.xpose.msra.mxu0 0.0
    %95 = vmatprep.subr.mxu0 0.0
    %96 = vmatpush1.xpose.msra.mxu0 0.0
    %97 = vmatprep.subr.mxu0 0.0
    %98 = vmatpush1.xpose.msra.mxu0 0.0
    %99 = vmatprep.subr.mxu0 0.0
    %v100 = vand.u32 %v67, 4294901760
    %101 = vmatpush1.xpose.msra.mxu0 %v100
    %102 = vmatprep.subr.mxu0 0.0
    %103 = vmatpush2.xpose.msra.mxu0 0.0
    %104 = vmatprep.subr.mxu0 0.0
    %105 = vmatpush2.xpose.msra.mxu0 0.0
    %106 = vmatprep.subr.mxu0 0.0
    %107 = vmatpush2.xpose.msra.mxu0 0.0
    %108 = vmatprep.subr.mxu0 0.0
    %109 = vmatpush2.xpose.msra.mxu0 0.0
    %110 = vmatprep.subr.mxu0 0.0
    %111 = vmatpush2.xpose.msra.mxu0 0.0
    %112 = vmatprep.subr.mxu0 0.0
    %113 = vmatpush2.xpose.msra.mxu0 0.0
    %114 = vmatprep.subr.mxu0 0.0
    %115 = vmatpush2.xpose.msra.mxu0 0.0
    %116 = vmatprep.subr.mxu0 0.0
    %117 = vmatpush2.xpose.msra.mxu0 0.0
    %118 = vmatprep.subr.mxu0 0.0
    %119 = vmatpush2.xpose.msra.mxu0 0.0
    %120 = vmatprep.subr.mxu0 0.0
    %121 = vmatpush2.xpose.msra.mxu0 0.0
    %122 = vmatprep.subr.mxu0 0.0
    %123 = vmatpush2.xpose.msra.mxu0 0.0
    %124 = vmatprep.subr.mxu0 0.0
    %125 = vmatpush2.xpose.msra.mxu0 0.0
    %126 = vmatprep.subr.mxu0 0.0
    %127 = vmatpush2.xpose.msra.mxu0 0.0
    %128 = vmatprep.subr.mxu0 0.0
    %129 = vmatpush2.xpose.msra.mxu0 0.0
    %130 = vmatprep.subr.mxu0 0.0
    %131 = vmatpush2.xpose.msra.mxu0 0.0
    %132 = vmatprep.subr.mxu0 0.0
    %133 = vmatpush2.xpose.msra.mxu0 0.0
    %134 = vmatprep.mubr.f32.mxu0 0.0
    %v135 = vand.u32 %v64, 4294901760
    %v136 = vsub.f32 %v64, %v135
    %v137 = vand.u32 %v136, 4294901760
    %v138 = vsub.f32 %v136, %v137
    %v139 = vand.u32 %v138, 4294901760
    %140 = vmatmul.mubr.f32.gmra.mxu0 %v139
    %v141 = vpop.f32.mrf.mxu0
    %v142 = vadd.f32 0.0, %v141
    %v143 = vpop.f32.mrf.mxu0
    %144 = vdwg.mxu0
    %145 = vmatprep.subr.mxu0 0.0
    %146 = vmatpush1.xpose.msra.mxu0 0.0
    %147 = vmatprep.subr.mxu0 0.0
    %148 = vmatpush1.xpose.msra.mxu0 0.0
    %149 = vmatprep.subr.mxu0 0.0
    %150 = vmatpush1.xpose.msra.mxu0 0.0
    %151 = vmatprep.subr.mxu0 0.0
    %152 = vmatpush1.xpose.msra.mxu0 0.0
    %153 = vmatprep.subr.mxu0 0.0
    %154 = vmatpush1.xpose.msra.mxu0 0.0
    %155 = vmatprep.subr.mxu0 0.0
    %156 = vmatpush1.xpose.msra.mxu0 0.0
    %157 = vmatprep.subr.mxu0 0.0
    %158 = vmatpush1.xpose.msra.mxu0 0.0
    %159 = vmatprep.subr.mxu0 0.0
    %160 = vmatpush1.xpose.msra.mxu0 0.0
    %161 = vmatprep.subr.mxu0 0.0
    %162 = vmatpush1.xpose.msra.mxu0 0.0
    %163 = vmatprep.subr.mxu0 0.0
    %164 = vmatpush1.xpose.msra.mxu0 0.0
    %165 = vmatprep.subr.mxu0 0.0
    %166 = vmatpush1.xpose.msra.mxu0 0.0
    %167 = vmatprep.subr.mxu0 0.0
    %168 = vmatpush1.xpose.msra.mxu0 0.0
    %169 = vmatprep.subr.mxu0 0.0
    %170 = vmatpush1.xpose.msra.mxu0 0.0
    %171 = vmatprep.subr.mxu0 0.0
    %172 = vmatpush1.xpose.msra.mxu0 0.0
    %173 = vmatprep.subr.mxu0 0.0
    %174 = vmatpush1.xpose.msra.mxu0 0.0
    %175 = vmatprep.subr.mxu0 0.0
    %v176 = vand.u32 %v67, 4294901760
    %v177 = vsub.f32 %v67, %v176
    %v178 = vand.u32 %v177, 4294901760
    %v179 = vsub.f32 %v177, %v178
    %v180 = vand.u32 %v179, 4294901760
    %181 = vmatpush1.xpose.msra.mxu0 %v180
    %182 = vmatprep.subr.mxu0 0.0
    %183 = vmatpush2.xpose.msra.mxu0 0.0
    %184 = vmatprep.subr.mxu0 0.0
    %185 = vmatpush2.xpose.msra.mxu0 0.0
    %186 = vmatprep.subr.mxu0 0.0
    %187 = vmatpush2.xpose.msra.mxu0 0.0
    %188 = vmatprep.subr.mxu0 0.0
    %189 = vmatpush2.xpose.msra.mxu0 0.0
    %190 = vmatprep.subr.mxu0 0.0
    %191 = vmatpush2.xpose.msra.mxu0 0.0
    %192 = vmatprep.subr.mxu0 0.0
    %193 = vmatpush2.xpose.msra.mxu0 0.0
    %194 = vmatprep.subr.mxu0 0.0
    %195 = vmatpush2.xpose.msra.mxu0 0.0
    %196 = vmatprep.subr.mxu0 0.0
    %197 = vmatpush2.xpose.msra.mxu0 0.0
    %198 = vmatprep.subr.mxu0 0.0
    %199 = vmatpush2.xpose.msra.mxu0 0.0
    %200 = vmatprep.subr.mxu0 0.0
    %201 = vmatpush2.xpose.msra.mxu0 0.0
    %202 = vmatprep.subr.mxu0 0.0
    %203 = vmatpush2.xpose.msra.mxu0 0.0
    %204 = vmatprep.subr.mxu0 0.0
    %205 = vmatpush2.xpose.msra.mxu0 0.0
    %206 = vmatprep.subr.mxu0 0.0
    %207 = vmatpush2.xpose.msra.mxu0 0.0
    %208 = vmatprep.subr.mxu0 0.0
    %209 = vmatpush2.xpose.msra.mxu0 0.0
    %210 = vmatprep.subr.mxu0 0.0
    %211 = vmatpush2.xpose.msra.mxu0 0.0
    %212 = vmatprep.subr.mxu0 0.0
    %213 = vmatpush2.xpose.msra.mxu0 0.0
    %214 = vmatprep.mubr.f32.mxu0 0.0
    %v215 = vand.u32 %v64, 4294901760
    %216 = vmatmul.mubr.f32.gmra.mxu0 %v215
    %v217 = vpop.f32.mrf.mxu0
    %v218 = vadd.f32 %v142, %v217
    %v219 = vpop.f32.mrf.mxu0
    %220 = vdwg.mxu0
    %221 = vmatprep.subr.mxu0 0.0
    %222 = vmatpush1.xpose.msra.mxu0 0.0
    %223 = vmatprep.subr.mxu0 0.0
    %224 = vmatpush1.xpose.msra.mxu0 0.0
    %225 = vmatprep.subr.mxu0 0.0
    %226 = vmatpush1.xpose.msra.mxu0 0.0
    %227 = vmatprep.subr.mxu0 0.0
    %228 = vmatpush1.xpose.msra.mxu0 0.0
    %229 = vmatprep.subr.mxu0 0.0
    %230 = vmatpush1.xpose.msra.mxu0 0.0
    %231 = vmatprep.subr.mxu0 0.0
    %232 = vmatpush1.xpose.msra.mxu0 0.0
    %233 = vmatprep.subr.mxu0 0.0
    %234 = vmatpush1.xpose.msra.mxu0 0.0
    %235 = vmatprep.subr.mxu0 0.0
    %236 = vmatpush1.xpose.msra.mxu0 0.0
    %237 = vmatprep.subr.mxu0 0.0
    %238 = vmatpush1.xpose.msra.mxu0 0.0
    %239 = vmatprep.subr.mxu0 0.0
    %240 = vmatpush1.xpose.msra.mxu0 0.0
    %241 = vmatprep.subr.mxu0 0.0
    %242 = vmatpush1.xpose.msra.mxu0 0.0
    %243 = vmatprep.subr.mxu0 0.0
    %244 = vmatpush1.xpose.msra.mxu0 0.0
    %245 = vmatprep.subr.mxu0 0.0
    %246 = vmatpush1.xpose.msra.mxu0 0.0
    %247 = vmatprep.subr.mxu0 0.0
    %248 = vmatpush1.xpose.msra.mxu0 0.0
    %249 = vmatprep.subr.mxu0 0.0
    %250 = vmatpush1.xpose.msra.mxu0 0.0
    %251 = vmatprep.subr.mxu0 0.0
    %v252 = vand.u32 %v67, 4294901760
    %v253 = vsub.f32 %v67, %v252
    %254 = vmatpush1.xpose.msra.mxu0 %v253
    %255 = vmatprep.subr.mxu0 0.0
    %256 = vmatpush2.xpose.msra.mxu0 0.0
    %257 = vmatprep.subr.mxu0 0.0
    %258 = vmatpush2.xpose.msra.mxu0 0.0
    %259 = vmatprep.subr.mxu0 0.0
    %260 = vmatpush2.xpose.msra.mxu0 0.0
    %261 = vmatprep.subr.mxu0 0.0
    %262 = vmatpush2.xpose.msra.mxu0 0.0
    %263 = vmatprep.subr.mxu0 0.0
    %264 = vmatpush2.xpose.msra.mxu0 0.0
    %265 = vmatprep.subr.mxu0 0.0
    %266 = vmatpush2.xpose.msra.mxu0 0.0
    %267 = vmatprep.subr.mxu0 0.0
    %268 = vmatpush2.xpose.msra.mxu0 0.0
    %269 = vmatprep.subr.mxu0 0.0
    %270 = vmatpush2.xpose.msra.mxu0 0.0
    %271 = vmatprep.subr.mxu0 0.0
    %272 = vmatpush2.xpose.msra.mxu0 0.0
    %273 = vmatprep.subr.mxu0 0.0
    %274 = vmatpush2.xpose.msra.mxu0 0.0
    %275 = vmatprep.subr.mxu0 0.0
    %276 = vmatpush2.xpose.msra.mxu0 0.0
    %277 = vmatprep.subr.mxu0 0.0
    %278 = vmatpush2.xpose.msra.mxu0 0.0
    %279 = vmatprep.subr.mxu0 0.0
    %280 = vmatpush2.xpose.msra.mxu0 0.0
    %281 = vmatprep.subr.mxu0 0.0
    %282 = vmatpush2.xpose.msra.mxu0 0.0
    %283 = vmatprep.subr.mxu0 0.0
    %284 = vmatpush2.xpose.msra.mxu0 0.0
    %285 = vmatprep.subr.mxu0 0.0
    %286 = vmatpush2.xpose.msra.mxu0 0.0
    %287 = vmatprep.mubr.f32.mxu0 0.0
    %v288 = vand.u32 %v64, 4294901760
    %v289 = vsub.f32 %v64, %v288
    %290 = vmatmul.mubr.f32.gmra.mxu0 %v289
    %v291 = vpop.f32.mrf.mxu0
    %v292 = vadd.f32 %v218, %v291
    %v293 = vpop.f32.mrf.mxu0
    %294 = vdwg.mxu0
    %295 = vmatprep.subr.mxu0 0.0
    %296 = vmatpush1.xpose.msra.mxu0 0.0
    %297 = vmatprep.subr.mxu0 0.0
    %298 = vmatpush1.xpose.msra.mxu0 0.0
    %299 = vmatprep.subr.mxu0 0.0
    %300 = vmatpush1.xpose.msra.mxu0 0.0
    %301 = vmatprep.subr.mxu0 0.0
    %302 = vmatpush1.xpose.msra.mxu0 0.0
    %303 = vmatprep.subr.mxu0 0.0
    %304 = vmatpush1.xpose.msra.mxu0 0.0
    %305 = vmatprep.subr.mxu0 0.0
    %306 = vmatpush1.xpose.msra.mxu0 0.0
    %307 = vmatprep.subr.mxu0 0.0
    %308 = vmatpush1.xpose.msra.mxu0 0.0
    %309 = vmatprep.subr.mxu0 0.0
    %310 = vmatpush1.xpose.msra.mxu0 0.0
    %311 = vmatprep.subr.mxu0 0.0
    %312 = vmatpush1.xpose.msra.mxu0 0.0
    %313 = vmatprep.subr.mxu0 0.0
    %314 = vmatpush1.xpose.msra.mxu0 0.0
    %315 = vmatprep.subr.mxu0 0.0
    %316 = vmatpush1.xpose.msra.mxu0 0.0
    %317 = vmatprep.subr.mxu0 0.0
    %318 = vmatpush1.xpose.msra.mxu0 0.0
    %319 = vmatprep.subr.mxu0 0.0
    %320 = vmatpush1.xpose.msra.mxu0 0.0
    %321 = vmatprep.subr.mxu0 0.0
    %322 = vmatpush1.xpose.msra.mxu0 0.0
    %323 = vmatprep.subr.mxu0 0.0
    %324 = vmatpush1.xpose.msra.mxu0 0.0
    %325 = vmatprep.subr.mxu0 0.0
    %v326 = vand.u32 %v67, 4294901760
    %327 = vmatpush1.xpose.msra.mxu0 %v326
    %328 = vmatprep.subr.mxu0 0.0
    %329 = vmatpush2.xpose.msra.mxu0 0.0
    %330 = vmatprep.subr.mxu0 0.0
    %331 = vmatpush2.xpose.msra.mxu0 0.0
    %332 = vmatprep.subr.mxu0 0.0
    %333 = vmatpush2.xpose.msra.mxu0 0.0
    %334 = vmatprep.subr.mxu0 0.0
    %335 = vmatpush2.xpose.msra.mxu0 0.0
    %336 = vmatprep.subr.mxu0 0.0
    %337 = vmatpush2.xpose.msra.mxu0 0.0
    %338 = vmatprep.subr.mxu0 0.0
    %339 = vmatpush2.xpose.msra.mxu0 0.0
    %340 = vmatprep.subr.mxu0 0.0
    %341 = vmatpush2.xpose.msra.mxu0 0.0
    %342 = vmatprep.subr.mxu0 0.0
    %343 = vmatpush2.xpose.msra.mxu0 0.0
    %344 = vmatprep.subr.mxu0 0.0
    %345 = vmatpush2.xpose.msra.mxu0 0.0
    %346 = vmatprep.subr.mxu0 0.0
    %347 = vmatpush2.xpose.msra.mxu0 0.0
    %348 = vmatprep.subr.mxu0 0.0
    %349 = vmatpush2.xpose.msra.mxu0 0.0
    %350 = vmatprep.subr.mxu0 0.0
    %351 = vmatpush2.xpose.msra.mxu0 0.0
    %352 = vmatprep.subr.mxu0 0.0
    %353 = vmatpush2.xpose.msra.mxu0 0.0
    %354 = vmatprep.subr.mxu0 0.0
    %355 = vmatpush2.xpose.msra.mxu0 0.0
    %356 = vmatprep.subr.mxu0 0.0
    %357 = vmatpush2.xpose.msra.mxu0 0.0
    %358 = vmatprep.subr.mxu0 0.0
    %359 = vmatpush2.xpose.msra.mxu0 0.0
    %360 = vmatprep.mubr.f32.mxu0 0.0
    %v361 = vand.u32 %v64, 4294901760
    %v362 = vsub.f32 %v64, %v361
    %v363 = vand.u32 %v362, 4294901760
    %364 = vmatmul.mubr.f32.gmra.mxu0 %v363
    %v365 = vpop.f32.mrf.mxu0
    %v366 = vadd.f32 %v292, %v365
    %v367 = vpop.f32.mrf.mxu0
    %368 = vdwg.mxu0
    %369 = vmatprep.subr.mxu0 0.0
    %370 = vmatpush1.xpose.msra.mxu0 0.0
    %371 = vmatprep.subr.mxu0 0.0
    %372 = vmatpush1.xpose.msra.mxu0 0.0
    %373 = vmatprep.subr.mxu0 0.0
    %374 = vmatpush1.xpose.msra.mxu0 0.0
    %375 = vmatprep.subr.mxu0 0.0
    %376 = vmatpush1.xpose.msra.mxu0 0.0
    %377 = vmatprep.subr.mxu0 0.0
    %378 = vmatpush1.xpose.msra.mxu0 0.0
    %379 = vmatprep.subr.mxu0 0.0
    %380 = vmatpush1.xpose.msra.mxu0 0.0
    %381 = vmatprep.subr.mxu0 0.0
    %382 = vmatpush1.xpose.msra.mxu0 0.0
    %383 = vmatprep.subr.mxu0 0.0
    %384 = vmatpush1.xpose.msra.mxu0 0.0
    %385 = vmatprep.subr.mxu0 0.0
    %386 = vmatpush1.xpose.msra.mxu0 0.0
    %387 = vmatprep.subr.mxu0 0.0
    %388 = vmatpush1.xpose.msra.mxu0 0.0
    %389 = vmatprep.subr.mxu0 0.0
    %390 = vmatpush1.xpose.msra.mxu0 0.0
    %391 = vmatprep.subr.mxu0 0.0
    %392 = vmatpush1.xpose.msra.mxu0 0.0
    %393 = vmatprep.subr.mxu0 0.0
    %394 = vmatpush1.xpose.msra.mxu0 0.0
    %395 = vmatprep.subr.mxu0 0.0
    %396 = vmatpush1.xpose.msra.mxu0 0.0
    %397 = vmatprep.subr.mxu0 0.0
    %398 = vmatpush1.xpose.msra.mxu0 0.0
    %399 = vmatprep.subr.mxu0 0.0
    %v400 = vand.u32 %v67, 4294901760
    %v401 = vsub.f32 %v67, %v400
    %v402 = vand.u32 %v401, 4294901760
    %403 = vmatpush1.xpose.msra.mxu0 %v402
    %404 = vmatprep.subr.mxu0 0.0
    %405 = vmatpush2.xpose.msra.mxu0 0.0
    %406 = vmatprep.subr.mxu0 0.0
    %407 = vmatpush2.xpose.msra.mxu0 0.0
    %408 = vmatprep.subr.mxu0 0.0
    %409 = vmatpush2.xpose.msra.mxu0 0.0
    %410 = vmatprep.subr.mxu0 0.0
    %411 = vmatpush2.xpose.msra.mxu0 0.0
    %412 = vmatprep.subr.mxu0 0.0
    %413 = vmatpush2.xpose.msra.mxu0 0.0
    %414 = vmatprep.subr.mxu0 0.0
    %415 = vmatpush2.xpose.msra.mxu0 0.0
    %416 = vmatprep.subr.mxu0 0.0
    %417 = vmatpush2.xpose.msra.mxu0 0.0
    %418 = vmatprep.subr.mxu0 0.0
    %419 = vmatpush2.xpose.msra.mxu0 0.0
    %420 = vmatprep.subr.mxu0 0.0
    %421 = vmatpush2.xpose.msra.mxu0 0.0
    %422 = vmatprep.subr.mxu0 0.0
    %423 = vmatpush2.xpose.msra.mxu0 0.0
    %424 = vmatprep.subr.mxu0 0.0
    %425 = vmatpush2.xpose.msra.mxu0 0.0
    %426 = vmatprep.subr.mxu0 0.0
    %427 = vmatpush2.xpose.msra.mxu0 0.0
    %428 = vmatprep.subr.mxu0 0.0
    %429 = vmatpush2.xpose.msra.mxu0 0.0
    %430 = vmatprep.subr.mxu0 0.0
    %431 = vmatpush2.xpose.msra.mxu0 0.0
    %432 = vmatprep.subr.mxu0 0.0
    %433 = vmatpush2.xpose.msra.mxu0 0.0
    %434 = vmatprep.subr.mxu0 0.0
    %435 = vmatpush2.xpose.msra.mxu0 0.0
    %436 = vmatprep.mubr.f32.mxu0 0.0
    %v437 = vand.u32 %v64, 4294901760
    %438 = vmatmul.mubr.f32.gmra.mxu0 %v437
    %v439 = vpop.f32.mrf.mxu0
    %v440 = vadd.f32 %v366, %v439
    %v441 = vpop.f32.mrf.mxu0
    %442 = vdwg.mxu0
    %443 = vmatprep.subr.mxu0 0.0
    %444 = vmatpush1.xpose.msra.mxu0 0.0
    %445 = vmatprep.subr.mxu0 0.0
    %446 = vmatpush1.xpose.msra.mxu0 0.0
    %447 = vmatprep.subr.mxu0 0.0
    %448 = vmatpush1.xpose.msra.mxu0 0.0
    %449 = vmatprep.subr.mxu0 0.0
    %450 = vmatpush1.xpose.msra.mxu0 0.0
    %451 = vmatprep.subr.mxu0 0.0
    %452 = vmatpush1.xpose.msra.mxu0 0.0
    %453 = vmatprep.subr.mxu0 0.0
    %454 = vmatpush1.xpose.msra.mxu0 0.0
    %455 = vmatprep.subr.mxu0 0.0
    %456 = vmatpush1.xpose.msra.mxu0 0.0
    %457 = vmatprep.subr.mxu0 0.0
    %458 = vmatpush1.xpose.msra.mxu0 0.0
    %459 = vmatprep.subr.mxu0 0.0
    %460 = vmatpush1.xpose.msra.mxu0 0.0
    %461 = vmatprep.subr.mxu0 0.0
    %462 = vmatpush1.xpose.msra.mxu0 0.0
    %463 = vmatprep.subr.mxu0 0.0
    %464 = vmatpush1.xpose.msra.mxu0 0.0
    %465 = vmatprep.subr.mxu0 0.0
    %466 = vmatpush1.xpose.msra.mxu0 0.0
    %467 = vmatprep.subr.mxu0 0.0
    %468 = vmatpush1.xpose.msra.mxu0 0.0
    %469 = vmatprep.subr.mxu0 0.0
    %470 = vmatpush1.xpose.msra.mxu0 0.0
    %471 = vmatprep.subr.mxu0 0.0
    %472 = vmatpush1.xpose.msra.mxu0 0.0
    %473 = vmatprep.subr.mxu0 0.0
    %v474 = vand.u32 %v67, 4294901760
    %475 = vmatpush1.xpose.msra.mxu0 %v474
    %476 = vmatprep.subr.mxu0 0.0
    %477 = vmatpush2.xpose.msra.mxu0 0.0
    %478 = vmatprep.subr.mxu0 0.0
    %479 = vmatpush2.xpose.msra.mxu0 0.0
    %480 = vmatprep.subr.mxu0 0.0
    %481 = vmatpush2.xpose.msra.mxu0 0.0
    %482 = vmatprep.subr.mxu0 0.0
    %483 = vmatpush2.xpose.msra.mxu0 0.0
    %484 = vmatprep.subr.mxu0 0.0
    %485 = vmatpush2.xpose.msra.mxu0 0.0
    %486 = vmatprep.subr.mxu0 0.0
    %487 = vmatpush2.xpose.msra.mxu0 0.0
    %488 = vmatprep.subr.mxu0 0.0
    %489 = vmatpush2.xpose.msra.mxu0 0.0
    %490 = vmatprep.subr.mxu0 0.0
    %491 = vmatpush2.xpose.msra.mxu0 0.0
    %492 = vmatprep.subr.mxu0 0.0
    %493 = vmatpush2.xpose.msra.mxu0 0.0
    %494 = vmatprep.subr.mxu0 0.0
    %495 = vmatpush2.xpose.msra.mxu0 0.0
    %496 = vmatprep.subr.mxu0 0.0
    %497 = vmatpush2.xpose.msra.mxu0 0.0
    %498 = vmatprep.subr.mxu0 0.0
    %499 = vmatpush2.xpose.msra.mxu0 0.0
    %500 = vmatprep.subr.mxu0 0.0
    %501 = vmatpush2.xpose.msra.mxu0 0.0
    %502 = vmatprep.subr.mxu0 0.0
    %503 = vmatpush2.xpose.msra.mxu0 0.0
    %504 = vmatprep.subr.mxu0 0.0
    %505 = vmatpush2.xpose.msra.mxu0 0.0
    %506 = vmatprep.subr.mxu0 0.0
    %507 = vmatpush2.xpose.msra.mxu0 0.0
    %508 = vmatprep.mubr.f32.mxu0 0.0
    %v509 = vand.u32 %v64, 4294901760
    %510 = vmatmul.mubr.f32.gmra.mxu0 %v509
    %v511 = vpop.f32.mrf.mxu0
    %v512 = vadd.f32 %v440, %v511
    %v513 = vpop.f32.mrf.mxu0
    %514 = vdwg.mxu0
    %s515 = sld [smem:[#allocation8]]
    %s516 = sld [smem:[#allocation8 + $0x1]]
    %s517 = sld [smem:[#allocation8 + $0x2]]
    %s518 = sld [smem:[#allocation8 + $0x3]]
    %s519 = sld [smem:[#allocation8 + $0x4]]
    %v520 = vstv %s515
    %v521 = vadd.f32 %v512, %v520
    %v522 = vxor.u32 %v512, 2147483648
    %v523 = vmul.f32 %v522, 1.442695
    %v524 = vpow.pop %v523
    %v525 = vadd.f32 %v524, 1.0
    %v526 = vrcp.pop %v525
    %v527 = vmul.f32 1.0, %v526
    %v529 = vrot.slane %v527, 1
    %v531 = vmul.f32 %v521, %v529
    %v532 = vstv %s516
    %vm533 = vcmask 261120
    %v535 = vsel %vm533, %v61, 0
    %v538 = vsel %vm533, %v59, 0
    %540 = vmatprep.subr.mxu0 0.0
    %541 = vmatpush1.xpose.msra.mxu0 0.0
    %542 = vmatprep.subr.mxu0 0.0
    %543 = vmatpush1.xpose.msra.mxu0 0.0
    %544 = vmatprep.subr.mxu0 0.0
    %545 = vmatpush1.xpose.msra.mxu0 0.0
    %546 = vmatprep.subr.mxu0 0.0
    %547 = vmatpush1.xpose.msra.mxu0 0.0
    %548 = vmatprep.subr.mxu0 0.0
    %549 = vmatpush1.xpose.msra.mxu0 0.0
    %550 = vmatprep.subr.mxu0 0.0
    %551 = vmatpush1.xpose.msra.mxu0 0.0
    %552 = vmatprep.subr.mxu0 0.0
    %553 = vmatpush1.xpose.msra.mxu0 0.0
    %554 = vmatprep.subr.mxu0 0.0
    %555 = vmatpush1.xpose.msra.mxu0 0.0
    %556 = vmatprep.subr.mxu0 0.0
    %557 = vmatpush1.xpose.msra.mxu0 0.0
    %558 = vmatprep.subr.mxu0 0.0
    %559 = vmatpush1.xpose.msra.mxu0 0.0
    %560 = vmatprep.subr.mxu0 0.0
    %561 = vmatpush1.xpose.msra.mxu0 0.0
    %562 = vmatprep.subr.mxu0 0.0
    %563 = vmatpush1.xpose.msra.mxu0 0.0
    %564 = vmatprep.subr.mxu0 0.0
    %565 = vmatpush1.xpose.msra.mxu0 0.0
    %566 = vmatprep.subr.mxu0 0.0
    %567 = vmatpush1.xpose.msra.mxu0 0.0
    %568 = vmatprep.subr.mxu0 0.0
    %569 = vmatpush1.xpose.msra.mxu0 0.0
    %570 = vmatprep.subr.mxu0 0.0
    %v571 = vand.u32 %v538, 4294901760
    %572 = vmatpush1.xpose.msra.mxu0 %v571
    %573 = vmatprep.subr.mxu0 0.0
    %574 = vmatpush2.xpose.msra.mxu0 0.0
    %575 = vmatprep.subr.mxu0 0.0
    %576 = vmatpush2.xpose.msra.mxu0 0.0
    %577 = vmatprep.subr.mxu0 0.0
    %578 = vmatpush2.xpose.msra.mxu0 0.0
    %579 = vmatprep.subr.mxu0 0.0
    %580 = vmatpush2.xpose.msra.mxu0 0.0
    %581 = vmatprep.subr.mxu0 0.0
    %582 = vmatpush2.xpose.msra.mxu0 0.0
    %583 = vmatprep.subr.mxu0 0.0
    %584 = vmatpush2.xpose.msra.mxu0 0.0
    %585 = vmatprep.subr.mxu0 0.0
    %586 = vmatpush2.xpose.msra.mxu0 0.0
    %587 = vmatprep.subr.mxu0 0.0
    %588 = vmatpush2.xpose.msra.mxu0 0.0
    %589 = vmatprep.subr.mxu0 0.0
    %590 = vmatpush2.xpose.msra.mxu0 0.0
    %591 = vmatprep.subr.mxu0 0.0
    %592 = vmatpush2.xpose.msra.mxu0 0.0
    %593 = vmatprep.subr.mxu0 0.0
    %594 = vmatpush2.xpose.msra.mxu0 0.0
    %595 = vmatprep.subr.mxu0 0.0
    %596 = vmatpush2.xpose.msra.mxu0 0.0
    %597 = vmatprep.subr.mxu0 0.0
    %598 = vmatpush2.xpose.msra.mxu0 0.0
    %599 = vmatprep.subr.mxu0 0.0
    %600 = vmatpush2.xpose.msra.mxu0 0.0
    %601 = vmatprep.subr.mxu0 0.0
    %602 = vmatpush2.xpose.msra.mxu0 0.0
    %603 = vmatprep.subr.mxu0 0.0
    %604 = vmatpush2.xpose.msra.mxu0 0.0
    %605 = vmatprep.mubr.f32.mxu0 0.0
    %v606 = vand.u32 %v535, 4294901760
    %v607 = vsub.f32 %v535, %v606
    %v608 = vand.u32 %v607, 4294901760
    %v609 = vsub.f32 %v607, %v608
    %v610 = vand.u32 %v609, 4294901760
    %611 = vmatmul.mubr.f32.gmra.mxu0 %v610
    %v612 = vpop.f32.mrf.mxu0
    %v613 = vadd.f32 %v532, %v612
    %v614 = vpop.f32.mrf.mxu0
    %615 = vdwg.mxu0
    %616 = vmatprep.subr.mxu0 0.0
    %617 = vmatpush1.xpose.msra.mxu0 0.0
    %618 = vmatprep.subr.mxu0 0.0
    %619 = vmatpush1.xpose.msra.mxu0 0.0
    %620 = vmatprep.subr.mxu0 0.0
    %621 = vmatpush1.xpose.msra.mxu0 0.0
    %622 = vmatprep.subr.mxu0 0.0
    %623 = vmatpush1.xpose.msra.mxu0 0.0
    %624 = vmatprep.subr.mxu0 0.0
    %625 = vmatpush1.xpose.msra.mxu0 0.0
    %626 = vmatprep.subr.mxu0 0.0
    %627 = vmatpush1.xpose.msra.mxu0 0.0
    %628 = vmatprep.subr.mxu0 0.0
    %629 = vmatpush1.xpose.msra.mxu0 0.0
    %630 = vmatprep.subr.mxu0 0.0
    %631 = vmatpush1.xpose.msra.mxu0 0.0
    %632 = vmatprep.subr.mxu0 0.0
    %633 = vmatpush1.xpose.msra.mxu0 0.0
    %634 = vmatprep.subr.mxu0 0.0
    %635 = vmatpush1.xpose.msra.mxu0 0.0
    %636 = vmatprep.subr.mxu0 0.0
    %637 = vmatpush1.xpose.msra.mxu0 0.0
    %638 = vmatprep.subr.mxu0 0.0
    %639 = vmatpush1.xpose.msra.mxu0 0.0
    %640 = vmatprep.subr.mxu0 0.0
    %641 = vmatpush1.xpose.msra.mxu0 0.0
    %642 = vmatprep.subr.mxu0 0.0
    %643 = vmatpush1.xpose.msra.mxu0 0.0
    %644 = vmatprep.subr.mxu0 0.0
    %645 = vmatpush1.xpose.msra.mxu0 0.0
    %646 = vmatprep.subr.mxu0 0.0
    %v647 = vand.u32 %v538, 4294901760
    %v648 = vsub.f32 %v538, %v647
    %v649 = vand.u32 %v648, 4294901760
    %v650 = vsub.f32 %v648, %v649
    %v651 = vand.u32 %v650, 4294901760
    %652 = vmatpush1.xpose.msra.mxu0 %v651
    %653 = vmatprep.subr.mxu0 0.0
    %654 = vmatpush2.xpose.msra.mxu0 0.0
    %655 = vmatprep.subr.mxu0 0.0
    %656 = vmatpush2.xpose.msra.mxu0 0.0
    %657 = vmatprep.subr.mxu0 0.0
    %658 = vmatpush2.xpose.msra.mxu0 0.0
    %659 = vmatprep.subr.mxu0 0.0
    %660 = vmatpush2.xpose.msra.mxu0 0.0
    %661 = vmatprep.subr.mxu0 0.0
    %662 = vmatpush2.xpose.msra.mxu0 0.0
    %663 = vmatprep.subr.mxu0 0.0
    %664 = vmatpush2.xpose.msra.mxu0 0.0
    %665 = vmatprep.subr.mxu0 0.0
    %666 = vmatpush2.xpose.msra.mxu0 0.0
    %667 = vmatprep.subr.mxu0 0.0
    %668 = vmatpush2.xpose.msra.mxu0 0.0
    %669 = vmatprep.subr.mxu0 0.0
    %670 = vmatpush2.xpose.msra.mxu0 0.0
    %671 = vmatprep.subr.mxu0 0.0
    %672 = vmatpush2.xpose.msra.mxu0 0.0
    %673 = vmatprep.subr.mxu0 0.0
    %674 = vmatpush2.xpose.msra.mxu0 0.0
    %675 = vmatprep.subr.mxu0 0.0
    %676 = vmatpush2.xpose.msra.mxu0 0.0
    %677 = vmatprep.subr.mxu0 0.0
    %678 = vmatpush2.xpose.msra.mxu0 0.0
    %679 = vmatprep.subr.mxu0 0.0
    %680 = vmatpush2.xpose.msra.mxu0 0.0
    %681 = vmatprep.subr.mxu0 0.0
    %682 = vmatpush2.xpose.msra.mxu0 0.0
    %683 = vmatprep.subr.mxu0 0.0
    %684 = vmatpush2.xpose.msra.mxu0 0.0
    %685 = vmatprep.mubr.f32.mxu0 0.0
    %v686 = vand.u32 %v535, 4294901760
    %687 = vmatmul.mubr.f32.gmra.mxu0 %v686
    %v688 = vpop.f32.mrf.mxu0
    %v689 = vadd.f32 %v613, %v688
    %v690 = vpop.f32.mrf.mxu0
    %691 = vdwg.mxu0
    %692 = vmatprep.subr.mxu0 0.0
    %693 = vmatpush1.xpose.msra.mxu0 0.0
    %694 = vmatprep.subr.mxu0 0.0
    %695 = vmatpush1.xpose.msra.mxu0 0.0
    %696 = vmatprep.subr.mxu0 0.0
    %697 = vmatpush1.xpose.msra.mxu0 0.0
    %698 = vmatprep.subr.mxu0 0.0
    %699 = vmatpush1.xpose.msra.mxu0 0.0
    %700 = vmatprep.subr.mxu0 0.0
    %701 = vmatpush1.xpose.msra.mxu0 0.0
    %702 = vmatprep.subr.mxu0 0.0
    %703 = vmatpush1.xpose.msra.mxu0 0.0
    %704 = vmatprep.subr.mxu0 0.0
    %705 = vmatpush1.xpose.msra.mxu0 0.0
    %706 = vmatprep.subr.mxu0 0.0
    %707 = vmatpush1.xpose.msra.mxu0 0.0
    %708 = vmatprep.subr.mxu0 0.0
    %709 = vmatpush1.xpose.msra.mxu0 0.0
    %710 = vmatprep.subr.mxu0 0.0
    %711 = vmatpush1.xpose.msra.mxu0 0.0
    %712 = vmatprep.subr.mxu0 0.0
    %713 = vmatpush1.xpose.msra.mxu0 0.0
    %714 = vmatprep.subr.mxu0 0.0
    %715 = vmatpush1.xpose.msra.mxu0 0.0
    %716 = vmatprep.subr.mxu0 0.0
    %717 = vmatpush1.xpose.msra.mxu0 0.0
    %718 = vmatprep.subr.mxu0 0.0
    %719 = vmatpush1.xpose.msra.mxu0 0.0
    %720 = vmatprep.subr.mxu0 0.0
    %721 = vmatpush1.xpose.msra.mxu0 0.0
    %722 = vmatprep.subr.mxu0 0.0
    %v723 = vand.u32 %v538, 4294901760
    %v724 = vsub.f32 %v538, %v723
    %725 = vmatpush1.xpose.msra.mxu0 %v724
    %726 = vmatprep.subr.mxu0 0.0
    %727 = vmatpush2.xpose.msra.mxu0 0.0
    %728 = vmatprep.subr.mxu0 0.0
    %729 = vmatpush2.xpose.msra.mxu0 0.0
    %730 = vmatprep.subr.mxu0 0.0
    %731 = vmatpush2.xpose.msra.mxu0 0.0
    %732 = vmatprep.subr.mxu0 0.0
    %733 = vmatpush2.xpose.msra.mxu0 0.0
    %734 = vmatprep.subr.mxu0 0.0
    %735 = vmatpush2.xpose.msra.mxu0 0.0
    %736 = vmatprep.subr.mxu0 0.0
    %737 = vmatpush2.xpose.msra.mxu0 0.0
    %738 = vmatprep.subr.mxu0 0.0
    %739 = vmatpush2.xpose.msra.mxu0 0.0
    %740 = vmatprep.subr.mxu0 0.0
    %741 = vmatpush2.xpose.msra.mxu0 0.0
    %742 = vmatprep.subr.mxu0 0.0
    %743 = vmatpush2.xpose.msra.mxu0 0.0
    %744 = vmatprep.subr.mxu0 0.0
    %745 = vmatpush2.xpose.msra.mxu0 0.0
    %746 = vmatprep.subr.mxu0 0.0
    %747 = vmatpush2.xpose.msra.mxu0 0.0
    %748 = vmatprep.subr.mxu0 0.0
    %749 = vmatpush2.xpose.msra.mxu0 0.0
    %750 = vmatprep.subr.mxu0 0.0
    %751 = vmatpush2.xpose.msra.mxu0 0.0
    %752 = vmatprep.subr.mxu0 0.0
    %753 = vmatpush2.xpose.msra.mxu0 0.0
    %754 = vmatprep.subr.mxu0 0.0
    %755 = vmatpush2.xpose.msra.mxu0 0.0
    %756 = vmatprep.subr.mxu0 0.0
    %757 = vmatpush2.xpose.msra.mxu0 0.0
    %758 = vmatprep.mubr.f32.mxu0 0.0
    %v759 = vand.u32 %v535, 4294901760
    %v760 = vsub.f32 %v535, %v759
    %761 = vmatmul.mubr.f32.gmra.mxu0 %v760
    %v762 = vpop.f32.mrf.mxu0
    %v763 = vadd.f32 %v689, %v762
    %v764 = vpop.f32.mrf.mxu0
    %765 = vdwg.mxu0
    %766 = vmatprep.subr.mxu0 0.0
    %767 = vmatpush1.xpose.msra.mxu0 0.0
    %768 = vmatprep.subr.mxu0 0.0
    %769 = vmatpush1.xpose.msra.mxu0 0.0
    %770 = vmatprep.subr.mxu0 0.0
    %771 = vmatpush1.xpose.msra.mxu0 0.0
    %772 = vmatprep.subr.mxu0 0.0
    %773 = vmatpush1.xpose.msra.mxu0 0.0
    %774 = vmatprep.subr.mxu0 0.0
    %775 = vmatpush1.xpose.msra.mxu0 0.0
    %776 = vmatprep.subr.mxu0 0.0
    %777 = vmatpush1.xpose.msra.mxu0 0.0
    %778 = vmatprep.subr.mxu0 0.0
    %779 = vmatpush1.xpose.msra.mxu0 0.0
    %780 = vmatprep.subr.mxu0 0.0
    %781 = vmatpush1.xpose.msra.mxu0 0.0
    %782 = vmatprep.subr.mxu0 0.0
    %783 = vmatpush1.xpose.msra.mxu0 0.0
    %784 = vmatprep.subr.mxu0 0.0
    %785 = vmatpush1.xpose.msra.mxu0 0.0
    %786 = vmatprep.subr.mxu0 0.0
    %787 = vmatpush1.xpose.msra.mxu0 0.0
    %788 = vmatprep.subr.mxu0 0.0
    %789 = vmatpush1.xpose.msra.mxu0 0.0
    %790 = vmatprep.subr.mxu0 0.0
    %791 = vmatpush1.xpose.msra.mxu0 0.0
    %792 = vmatprep.subr.mxu0 0.0
    %793 = vmatpush1.xpose.msra.mxu0 0.0
    %794 = vmatprep.subr.mxu0 0.0
    %795 = vmatpush1.xpose.msra.mxu0 0.0
    %796 = vmatprep.subr.mxu0 0.0
    %v797 = vand.u32 %v538, 4294901760
    %798 = vmatpush1.xpose.msra.mxu0 %v797
    %799 = vmatprep.subr.mxu0 0.0
    %800 = vmatpush2.xpose.msra.mxu0 0.0
    %801 = vmatprep.subr.mxu0 0.0
    %802 = vmatpush2.xpose.msra.mxu0 0.0
    %803 = vmatprep.subr.mxu0 0.0
    %804 = vmatpush2.xpose.msra.mxu0 0.0
    %805 = vmatprep.subr.mxu0 0.0
    %806 = vmatpush2.xpose.msra.mxu0 0.0
    %807 = vmatprep.subr.mxu0 0.0
    %808 = vmatpush2.xpose.msra.mxu0 0.0
    %809 = vmatprep.subr.mxu0 0.0
    %810 = vmatpush2.xpose.msra.mxu0 0.0
    %811 = vmatprep.subr.mxu0 0.0
    %812 = vmatpush2.xpose.msra.mxu0 0.0
    %813 = vmatprep.subr.mxu0 0.0
    %814 = vmatpush2.xpose.msra.mxu0 0.0
    %815 = vmatprep.subr.mxu0 0.0
    %816 = vmatpush2.xpose.msra.mxu0 0.0
    %817 = vmatprep.subr.mxu0 0.0
    %818 = vmatpush2.xpose.msra.mxu0 0.0
    %819 = vmatprep.subr.mxu0 0.0
    %820 = vmatpush2.xpose.msra.mxu0 0.0
    %821 = vmatprep.subr.mxu0 0.0
    %822 = vmatpush2.xpose.msra.mxu0 0.0
    %823 = vmatprep.subr.mxu0 0.0
    %824 = vmatpush2.xpose.msra.mxu0 0.0
    %825 = vmatprep.subr.mxu0 0.0
    %826 = vmatpush2.xpose.msra.mxu0 0.0
    %827 = vmatprep.subr.mxu0 0.0
    %828 = vmatpush2.xpose.msra.mxu0 0.0
    %829 = vmatprep.subr.mxu0 0.0
    %830 = vmatpush2.xpose.msra.mxu0 0.0
    %831 = vmatprep.mubr.f32.mxu0 0.0
    %v832 = vand.u32 %v535, 4294901760
    %v833 = vsub.f32 %v535, %v832
    %v834 = vand.u32 %v833, 4294901760
    %835 = vmatmul.mubr.f32.gmra.mxu0 %v834
    %v836 = vpop.f32.mrf.mxu0
    %v837 = vadd.f32 %v763, %v836
    %v838 = vpop.f32.mrf.mxu0
    %839 = vdwg.mxu0
    %840 = vmatprep.subr.mxu0 0.0
    %841 = vmatpush1.xpose.msra.mxu0 0.0
    %842 = vmatprep.subr.mxu0 0.0
    %843 = vmatpush1.xpose.msra.mxu0 0.0
    %844 = vmatprep.subr.mxu0 0.0
    %845 = vmatpush1.xpose.msra.mxu0 0.0
    %846 = vmatprep.subr.mxu0 0.0
    %847 = vmatpush1.xpose.msra.mxu0 0.0
    %848 = vmatprep.subr.mxu0 0.0
    %849 = vmatpush1.xpose.msra.mxu0 0.0
    %850 = vmatprep.subr.mxu0 0.0
    %851 = vmatpush1.xpose.msra.mxu0 0.0
    %852 = vmatprep.subr.mxu0 0.0
    %853 = vmatpush1.xpose.msra.mxu0 0.0
    %854 = vmatprep.subr.mxu0 0.0
    %855 = vmatpush1.xpose.msra.mxu0 0.0
    %856 = vmatprep.subr.mxu0 0.0
    %857 = vmatpush1.xpose.msra.mxu0 0.0
    %858 = vmatprep.subr.mxu0 0.0
    %859 = vmatpush1.xpose.msra.mxu0 0.0
    %860 = vmatprep.subr.mxu0 0.0
    %861 = vmatpush1.xpose.msra.mxu0 0.0
    %862 = vmatprep.subr.mxu0 0.0
    %863 = vmatpush1.xpose.msra.mxu0 0.0
    %864 = vmatprep.subr.mxu0 0.0
    %865 = vmatpush1.xpose.msra.mxu0 0.0
    %866 = vmatprep.subr.mxu0 0.0
    %867 = vmatpush1.xpose.msra.mxu0 0.0
    %868 = vmatprep.subr.mxu0 0.0
    %869 = vmatpush1.xpose.msra.mxu0 0.0
    %870 = vmatprep.subr.mxu0 0.0
    %v871 = vand.u32 %v538, 4294901760
    %v872 = vsub.f32 %v538, %v871
    %v873 = vand.u32 %v872, 4294901760
    %874 = vmatpush1.xpose.msra.mxu0 %v873
    %875 = vmatprep.subr.mxu0 0.0
    %876 = vmatpush2.xpose.msra.mxu0 0.0
    %877 = vmatprep.subr.mxu0 0.0
    %878 = vmatpush2.xpose.msra.mxu0 0.0
    %879 = vmatprep.subr.mxu0 0.0
    %880 = vmatpush2.xpose.msra.mxu0 0.0
    %881 = vmatprep.subr.mxu0 0.0
    %882 = vmatpush2.xpose.msra.mxu0 0.0
    %883 = vmatprep.subr.mxu0 0.0
    %884 = vmatpush2.xpose.msra.mxu0 0.0
    %885 = vmatprep.subr.mxu0 0.0
    %886 = vmatpush2.xpose.msra.mxu0 0.0
    %887 = vmatprep.subr.mxu0 0.0
    %888 = vmatpush2.xpose.msra.mxu0 0.0
    %889 = vmatprep.subr.mxu0 0.0
    %890 = vmatpush2.xpose.msra.mxu0 0.0
    %891 = vmatprep.subr.mxu0 0.0
    %892 = vmatpush2.xpose.msra.mxu0 0.0
    %893 = vmatprep.subr.mxu0 0.0
    %894 = vmatpush2.xpose.msra.mxu0 0.0
    %895 = vmatprep.subr.mxu0 0.0
    %896 = vmatpush2.xpose.msra.mxu0 0.0
    %897 = vmatprep.subr.mxu0 0.0
    %898 = vmatpush2.xpose.msra.mxu0 0.0
    %899 = vmatprep.subr.mxu0 0.0
    %900 = vmatpush2.xpose.msra.mxu0 0.0
    %901 = vmatprep.subr.mxu0 0.0
    %902 = vmatpush2.xpose.msra.mxu0 0.0
    %903 = vmatprep.subr.mxu0 0.0
    %904 = vmatpush2.xpose.msra.mxu0 0.0
    %905 = vmatprep.subr.mxu0 0.0
    %906 = vmatpush2.xpose.msra.mxu0 0.0
    %907 = vmatprep.mubr.f32.mxu0 0.0
    %v908 = vand.u32 %v535, 4294901760
    %909 = vmatmul.mubr.f32.gmra.mxu0 %v908
    %v910 = vpop.f32.mrf.mxu0
    %v911 = vadd.f32 %v837, %v910
    %v912 = vpop.f32.mrf.mxu0
    %913 = vdwg.mxu0
    %914 = vmatprep.subr.mxu0 0.0
    %915 = vmatpush1.xpose.msra.mxu0 0.0
    %916 = vmatprep.subr.mxu0 0.0
    %917 = vmatpush1.xpose.msra.mxu0 0.0
    %918 = vmatprep.subr.mxu0 0.0
    %919 = vmatpush1.xpose.msra.mxu0 0.0
    %920 = vmatprep.subr.mxu0 0.0
    %921 = vmatpush1.xpose.msra.mxu0 0.0
    %922 = vmatprep.subr.mxu0 0.0
    %923 = vmatpush1.xpose.msra.mxu0 0.0
    %924 = vmatprep.subr.mxu0 0.0
    %925 = vmatpush1.xpose.msra.mxu0 0.0
    %926 = vmatprep.subr.mxu0 0.0
    %927 = vmatpush1.xpose.msra.mxu0 0.0
    %928 = vmatprep.subr.mxu0 0.0
    %929 = vmatpush1.xpose.msra.mxu0 0.0
    %930 = vmatprep.subr.mxu0 0.0
    %931 = vmatpush1.xpose.msra.mxu0 0.0
    %932 = vmatprep.subr.mxu0 0.0
    %933 = vmatpush1.xpose.msra.mxu0 0.0
    %934 = vmatprep.subr.mxu0 0.0
    %935 = vmatpush1.xpose.msra.mxu0 0.0
    %936 = vmatprep.subr.mxu0 0.0
    %937 = vmatpush1.xpose.msra.mxu0 0.0
    %938 = vmatprep.subr.mxu0 0.0
    %939 = vmatpush1.xpose.msra.mxu0 0.0
    %940 = vmatprep.subr.mxu0 0.0
    %941 = vmatpush1.xpose.msra.mxu0 0.0
    %942 = vmatprep.subr.mxu0 0.0
    %943 = vmatpush1.xpose.msra.mxu0 0.0
    %944 = vmatprep.subr.mxu0 0.0
    %v945 = vand.u32 %v538, 4294901760
    %946 = vmatpush1.xpose.msra.mxu0 %v945
    %947 = vmatprep.subr.mxu0 0.0
    %948 = vmatpush2.xpose.msra.mxu0 0.0
    %949 = vmatprep.subr.mxu0 0.0
    %950 = vmatpush2.xpose.msra.mxu0 0.0
    %951 = vmatprep.subr.mxu0 0.0
    %952 = vmatpush2.xpose.msra.mxu0 0.0
    %953 = vmatprep.subr.mxu0 0.0
    %954 = vmatpush2.xpose.msra.mxu0 0.0
    %955 = vmatprep.subr.mxu0 0.0
    %956 = vmatpush2.xpose.msra.mxu0 0.0
    %957 = vmatprep.subr.mxu0 0.0
    %958 = vmatpush2.xpose.msra.mxu0 0.0
    %959 = vmatprep.subr.mxu0 0.0
    %960 = vmatpush2.xpose.msra.mxu0 0.0
    %961 = vmatprep.subr.mxu0 0.0
    %962 = vmatpush2.xpose.msra.mxu0 0.0
    %963 = vmatprep.subr.mxu0 0.0
    %964 = vmatpush2.xpose.msra.mxu0 0.0
    %965 = vmatprep.subr.mxu0 0.0
    %966 = vmatpush2.xpose.msra.mxu0 0.0
    %967 = vmatprep.subr.mxu0 0.0
    %968 = vmatpush2.xpose.msra.mxu0 0.0
    %969 = vmatprep.subr.mxu0 0.0
    %970 = vmatpush2.xpose.msra.mxu0 0.0
    %971 = vmatprep.subr.mxu0 0.0
    %972 = vmatpush2.xpose.msra.mxu0 0.0
    %973 = vmatprep.subr.mxu0 0.0
    %974 = vmatpush2.xpose.msra.mxu0 0.0
    %975 = vmatprep.subr.mxu0 0.0
    %976 = vmatpush2.xpose.msra.mxu0 0.0
    %977 = vmatprep.subr.mxu0 0.0
    %978 = vmatpush2.xpose.msra.mxu0 0.0
    %979 = vmatprep.mubr.f32.mxu0 0.0
    %v980 = vand.u32 %v535, 4294901760
    %981 = vmatmul.mubr.f32.gmra.mxu0 %v980
    %v982 = vpop.f32.mrf.mxu0
    %v983 = vadd.f32 %v911, %v982
    %v984 = vpop.f32.mrf.mxu0
    %985 = vdwg.mxu0
    %v986 = vstv %s517
    %v987 = vmul.f32 %v531, %v986
    %v988 = vstv %s518
    %v989 = vmul.f32 %v983, %v988
    %v990 = vadd.f32 %v987, %v989
    %v991 = vstv %s519
    %v992 = vadd.f32 %v990, %v991
    %v993 = vxor.u32 %v992, 2147483648
    %v994 = vmul.f32 %v993, 1.442695
    %v995 = vpow.pop %v994
    %v996 = vadd.f32 %v995, 1.0
    %v997 = vrcp.pop %v996
    %v998 = vmul.f32 1.0, %v997
    %vm999 = vcmask 8192
    %1000 = vst.msk [vmem:[#allocation9] sm:$0x1] %vm999, %v998
    // Predicated region
    $region34: #{tpu_custom_call.1} parent=1 // pred_check
      _
    $region35: #{tpu_custom_call.1} parent=1 // pred_check_branch
      %1002 = sbr.rel (0) target = $region37
    $region36: #{tpu_custom_call.1} parent=1 // pred_region
      %s1004 = ssub.s32 16, 16
      %1005 = vsyncadd [#allocation4], %s1004
      %s1007 = sshll.u32 [#allocation9], 4
      %s1008 = int_to_ptr.vmem [resolvable:$true] %s1007
      %1010 = dma.vmem_to_hbm [thread:$0]  %s1008, 16, %s5, [#allocation4]
    $region37: #{tpu_custom_call.1} parent=1 // pred_fallthru
      _
    // Predicated region
    $region38: #{tpu_custom_call.1} parent=1 // pred_check
      _
    $region39: #{tpu_custom_call.1} parent=1 // pred_check_branch
      %1012 = sbr.rel (0) target = $region41
    $region40: #{tpu_custom_call.1} parent=1 // pred_region
      %1013 = dma.done [#allocation4], 16
    $region41: #{tpu_custom_call.1} parent=1 // pred_fallthru
      _
    %1014 = vsyncpa [#allocation3], 1
    %1015 = vsyncpa [#allocation7], 1
    %1016 = vsyncpa [#allocation4], 1
    %1017 = vsyncpa [#allocation5], 1

</llo_original>
